<compile_context>
chip_gen: v7x
topology: tpu7x:2x2x1
jax: 0.10.0
libtpu: 0.0.40
codegen_flags: <defaults>
</compile_context>

<pallas_src>
import functools

import jax
import jax.numpy as jnp
from jax.experimental import pallas as pl
from jax.experimental.pallas import tpu as pltpu


def _softmax_ranking_loss_kernel(x_ref, t_ref, o_ref, *, fast):
    # One (TB, N) batch tile resident in VMEM per grid step.
    x = x_ref[...].astype(jnp.float32)
    t = t_ref[...].astype(jnp.float32)

    # Numerically-stable softmax statistics along dim=1 (lanes).
    m = jnp.max(x, axis=1, keepdims=True)
    e = jnp.exp(x - m)
    s = jnp.sum(e, axis=1, keepdims=True)

    if fast:
        # Analytic log-softmax form (drops the +1e-8 inside the log):
        #   loss_row = logsumexp(x) * sum(t) - sum(t * x)
        lse = m + jnp.log(s)  # (TB, 1)
        o_ref[...] = (lse * jnp.sum(t, axis=1, keepdims=True)
                      - jnp.sum(x * t, axis=1, keepdims=True))
    else:
        # Exact PyTorch semantics: keep the epsilon-clamped log.
        probs = e * pl.reciprocal(s, approx=False)
        o_ref[...] = -jnp.sum(jnp.log(probs + 1e-8) * t, axis=1, keepdims=True)


def _round_up(x, m):
    return pl.cdiv(x, m) * m


def _hw_budgets():
    """(vmem working-set budget, per-step DMA byte target), generation-aware."""
    cap = 128 * 1024 * 1024
    try:
        info = pltpu.get_tpu_info()
        cap = int(getattr(info, "vmem_capacity_bytes", cap))
    except Exception:
        pass
    if cap <= 64 * 1024 * 1024:
        # v7x: 64 MiB / TensorCore -> leave headroom; bigger tiles to cover 3.2 TB/s HBM.
        return 40 * 1024 * 1024, 4 * 1024 * 1024
    # v5e / v6e: 128 MiB physical.
    return 48 * 1024 * 1024, 2 * 1024 * 1024


def _pick_tile_rows(B, N, itemsize_x, itemsize_t, row_mult,
                    vmem_budget_bytes, dma_target_bytes, max_rows_per_tile):
    # DMA target: ~dma_target_bytes of pipelined input per grid step.
    per_row_in = N * (itemsize_x + itemsize_t)
    tb_dma = max(row_mult, (dma_target_bytes // per_row_in) // row_mult * row_mult)

    # Honest VMEM working set per row:
    #   2 pipeline buffers x (x + t) blocks at real itemsize
    # + ~3 f32 temporaries (upcast x/t, e, probs/logp).
    per_row_vmem = 2 * N * (itemsize_x + itemsize_t) + 3 * N * 4
    tb_vmem = max(row_mult, (vmem_budget_bytes // per_row_vmem) // row_mult * row_mult)

    tb = min(tb_dma, tb_vmem)
    # Never larger than the (rounded-up) batch.
    tb = min(tb, _round_up(B, row_mult))
    # Ensure >= 2 grid tiles when B allows, so both v7x TensorCores get work.
    if B >= 2 * row_mult:
        tb = min(tb, _round_up(pl.cdiv(B, 2), row_mult))
    if max_rows_per_tile is not None:
        tb = min(tb, max(row_mult, (int(max_rows_per_tile) // row_mult) * row_mult))
    return int(tb), int(per_row_vmem)


def softmax_ranking_loss(inputs, targets, is_reduce=True, *,
                         fast=False, max_rows_per_tile=None):
    assert inputs.shape == targets.shape
    assert inputs.ndim == 2
    B, N = inputs.shape

    itemsize_x = jnp.dtype(inputs.dtype).itemsize
    itemsize_t = jnp.dtype(targets.dtype).itemsize
    # Sublane packing: 16-bit dtypes pack 16 rows per vreg tile, 32-bit pack 8.
    row_mult = max(8, 32 // min(itemsize_x, itemsize_t))

    vmem_budget, dma_target = _hw_budgets()
    tb, per_row_vmem = _pick_tile_rows(B, N, itemsize_x, itemsize_t, row_mult,
                                       vmem_budget, dma_target, max_rows_per_tile)

    num_tiles = int(pl.cdiv(B, tb))

    # Derive the VMEM limit from the actual working set (+ generous headroom),
    # capped at the generation-aware budget.
    working_set = tb * per_row_vmem + 4 * tb * 4  # + output double-buffer (tiny)
    vmem_limit = int(min(vmem_budget, max(2 * working_set, 16 * 1024 * 1024)))

    bytes_in = B * N * (itemsize_x + itemsize_t)
    cost = pl.CostEstimate(
        flops=int(6 * B * N),
        transcendentals=int((1 if fast else 2) * B * N),  # exp (+ log) per element
        bytes_accessed=int(bytes_in + 4 * B),
    )

    kernel = functools.partial(_softmax_ranking_loss_kernel, fast=fast)

    per_row = pl.pallas_call(
        kernel,
        out_shape=jax.ShapeDtypeStruct((B, 1), jnp.float32),
        grid_spec=pltpu.PrefetchScalarGridSpec(
            num_scalar_prefetch=0,
            grid=(num_tiles,),
            in_specs=[
                pl.BlockSpec((tb, N), lambda i: (i, 0)),
                pl.BlockSpec((tb, N), lambda i: (i, 0)),
            ],
            out_specs=pl.BlockSpec((tb, 1), lambda i: (i, 0)),
        ),
        compiler_params=pltpu.CompilerParams(
            dimension_semantics=("parallel",),
            vmem_limit_bytes=vmem_limit,
        ),
        cost_estimate=cost,
    )(inputs, targets)

    loss = per_row[:, 0]  # (B,)
    if is_reduce:
        loss = jnp.mean(loss)
    return loss


def _reference(inputs, targets, is_reduce=True):
    probs = jax.nn.softmax(inputs.astype(jnp.float32) + 1e-8, axis=1)
    loss = -jnp.sum(jnp.log(probs + 1e-8) * targets.astype(jnp.float32), axis=1)
    return jnp.mean(loss) if is_reduce else loss


def _reference_fast(inputs, targets, is_reduce=True):
    logp = jax.nn.log_softmax(inputs.astype(jnp.float32), axis=1)
    loss = -jnp.sum(logp * targets.astype(jnp.float32), axis=1)
    return jnp.mean(loss) if is_reduce else loss


if __name__ == "__main__":
    key = jax.random.PRNGKey(0)
    k1, k2, k3, k4, k5, k6 = jax.random.split(key, 6)

    # Case 1: B not a multiple of the tile -> ragged final block, NO jnp.pad;
    # reduced (scalar) loss.
    B1, N1 = 20, 160
    x1 = jax.random.normal(k1, (B1, N1), dtype=jnp.float32)
    t1 = jax.nn.softmax(jax.random.normal(k2, (B1, N1), dtype=jnp.float32) * 2.0, axis=1)
    out1 = softmax_ranking_loss(x1, t1, is_reduce=True)
    jax.block_until_ready(out1)
    ref1 = _reference(x1, t1, True)
    assert jnp.allclose(out1, ref1, rtol=1e-5, atol=1e-5), (out1, ref1)

    # Case 2: multi-tile grid over the batch (pipelining + "parallel" axis),
    # per-row output (is_reduce=False).
    B2, N2 = 64, 128
    x2 = jax.random.normal(k3, (B2, N2), dtype=jnp.float32)
    t2 = jax.nn.softmax(jax.random.normal(k4, (B2, N2), dtype=jnp.float32) * 2.0, axis=1)
    out2 = softmax_ranking_loss(x2, t2, is_reduce=False, max_rows_per_tile=16)
    jax.block_until_ready(out2)
    ref2 = _reference(x2, t2, False)
    assert jnp.allclose(out2, ref2, rtol=1e-5, atol=1e-5), (out2, ref2)

    # Case 3: bf16 inputs/targets (16-row sublane packing path), reduced.
    B3, N3 = 24, 256
    x3 = jax.random.normal(k5, (B3, N3), dtype=jnp.float32).astype(jnp.bfloat16)
    t3 = jax.nn.softmax(
        jax.random.normal(k6, (B3, N3), dtype=jnp.float32) * 2.0, axis=1
    ).astype(jnp.bfloat16)
    out3 = softmax_ranking_loss(x3, t3, is_reduce=True)
    jax.block_until_ready(out3)
    ref3 = _reference(x3, t3, True)
    assert jnp.allclose(out3, ref3, rtol=1e-4, atol=1e-4), (out3, ref3)

    # Case 4: opt-in fast (log-free) mode against its own analytic reference.
    out4 = softmax_ranking_loss(x1, t1, is_reduce=True, fast=True)
    jax.block_until_ready(out4)
    ref4 = _reference_fast(x1, t1, True)
    assert jnp.allclose(out4, ref4, rtol=1e-5, atol=1e-5), (out4, ref4)

    print("KERNEL_OK")
</pallas_src>

<mosaic_0001>
module attributes {stable_mosaic.version = 11 : i64} {
  func.func @_softmax_ranking_loss_kernel(%arg0: i32, %arg1: memref<16x160xf32, #tpu.memory_space<vmem>>, %arg2: memref<16x160xf32, #tpu.memory_space<vmem>>, %arg3: memref<16x1xf32, #tpu.memory_space<vmem>>) attributes {dimension_semantics = [#tpu.dimension_semantics<parallel>], iteration_bounds = array<i64: 2>, scalar_prefetch = 0 : i64, scratch_operands = 0 : i64, tpu.core_type = #tpu.core_type<tc>, window_params = [{transform_indices = @transform_0, window_bounds = array<i64: 16, 160>}, {transform_indices = @transform_1, window_bounds = array<i64: 16, 160>}, {transform_indices = @transform_2, window_bounds = array<i64: 16, 1>}]} {
    %c0 = arith.constant 0 : index
    %c0_0 = arith.constant 0 : index
    %0 = vector.load %arg1[%c0, %c0_0] : memref<16x160xf32, #tpu.memory_space<vmem>>, vector<16x160xf32>
    %c0_1 = arith.constant 0 : index
    %c0_2 = arith.constant 0 : index
    %1 = vector.load %arg2[%c0_1, %c0_2] : memref<16x160xf32, #tpu.memory_space<vmem>>, vector<16x160xf32>
    %cst = arith.constant dense<0xFF800000> : vector<16xf32>
    %2 = vector.multi_reduction <maximumf>, %0, %cst [1] : vector<16x160xf32> to vector<16xf32>
    %3 = vector.shape_cast %2 : vector<16xf32> to vector<16x1xf32>
    %4 = vector.broadcast %3 : vector<16x1xf32> to vector<16x160xf32>
    %5 = arith.subf %0, %4 : vector<16x160xf32>
    %6 = math.exp %5 : vector<16x160xf32>
    %cst_3 = arith.constant dense<0.000000e+00> : vector<16xf32>
    %7 = vector.multi_reduction <add>, %6, %cst_3 [1] : vector<16x160xf32> to vector<16xf32>
    %8 = vector.shape_cast %7 : vector<16xf32> to vector<16x1xf32>
    %9 = tpu.reciprocal %8 : vector<16x1xf32> -> vector<16x1xf32>
    %10 = vector.broadcast %9 : vector<16x1xf32> to vector<16x160xf32>
    %11 = arith.mulf %6, %10 : vector<16x160xf32>
    %cst_4 = arith.constant 9.99999993E-9 : f32
    %12 = vector.broadcast %cst_4 : f32 to vector<16x160xf32>
    %13 = arith.addf %11, %12 : vector<16x160xf32>
    %14 = math.log %13 : vector<16x160xf32>
    %15 = arith.mulf %14, %1 : vector<16x160xf32>
    %cst_5 = arith.constant dense<0.000000e+00> : vector<16xf32>
    %16 = vector.multi_reduction <add>, %15, %cst_5 [1] : vector<16x160xf32> to vector<16xf32>
    %17 = vector.shape_cast %16 : vector<16xf32> to vector<16x1xf32>
    %cst_6 = arith.constant 0.000000e+00 : f32
    %18 = vector.broadcast %cst_6 : f32 to vector<16x1xf32>
    %19 = arith.subf %18, %17 : vector<16x1xf32>
    %c0_7 = arith.constant 0 : index
    %c0_8 = arith.constant 0 : index
    %20 = vector.load %arg3[%c0_7, %c0_8] : memref<16x1xf32, #tpu.memory_space<vmem>>, vector<16x1xf32>
    tpu.vector_store %arg3[%c0_7, %c0_8], %19 {strides = array<i32>} : memref<16x1xf32, #tpu.memory_space<vmem>>, vector<16x1xf32>,
    return
  }
  func.func @transform_0(%arg0: i32) -> (i32, i32) {
    %c0_i32 = arith.constant 0 : i32
    %c0_i32_0 = arith.constant 0 : i32
    return %arg0, %c0_i32 : i32, i32
  }
  func.func @transform_1(%arg0: i32) -> (i32, i32) {
    %c0_i32 = arith.constant 0 : i32
    %c0_i32_0 = arith.constant 0 : i32
    return %arg0, %c0_i32 : i32, i32
  }
  func.func @transform_2(%arg0: i32) -> (i32, i32) {
    %c0_i32 = arith.constant 0 : i32
    %c0_i32_0 = arith.constant 0 : i32
    return %arg0, %c0_i32 : i32, i32
  }
}

</mosaic_0001>

<llo_original>
// kernel: tpu_custom_call.1
$region0: #{tpu_custom_call.1}
  #allocation0 [shape = 'u32[]', space=smem, size = 0x4, offset = 0x4, fixed_abs, tag = 'smem constant byte address 0x4 - core index']
  #allocation1 [shape = 'u32[144,128]{1,0:T(1,128)}', space=vmem, size = 0x12000, scoped, tag = 'internal scratch']
  %s0 = inlined_call_operand.hbm [shape: f32[20,160], index: 0, kind: input, shape index: {}]
  %s1 = inlined_call_operand.hbm [shape: f32[20,160], index: 1, kind: input, shape index: {}]
  %s2 = inlined_call_operand.vmem [shape: f32[20,1], index: 2, kind: output, shape index: {}]
  %s3 = sld [smem:[#allocation0]]
  $region97: #{tpu_custom_call.1} parent=0
    _
  %s5 = ssub.s32 1, %s3
  %s6 = scalar_select 0, %s5, %s3
  $region1: #{tpu_custom_call.1} parent=0
    #allocation2 [shape = 'u8[32768]{0}', space=vmem, size = 0x8000, scoped, tag = 'input window, operand 0']
    #allocation3 [shape = 's32[2]{0}', space=sflag, size = 0x8, scoped, tag = 'scoped memory for tpu_custom_call.1']
    #allocation4 [shape = 'u8[32768]{0}', space=vmem, size = 0x8000, scoped, tag = 'input window, operand 1']
    #allocation5 [shape = 's32[2]{0}', space=sflag, size = 0x8, scoped, tag = 'scoped memory for tpu_custom_call.1']
    #allocation6 [shape = 'u8[16384]{0}', space=vmem, size = 0x4000, scoped, tag = 'output window, operand 0']
    %7 = vsyncpa [#allocation3], 0
    %s8 = scalar_lea.sflag [#allocation3], 1
    %9 = vsyncpa %s8, 0
    %10 = vsyncpa [#allocation5], 0
    %s11 = scalar_lea.sflag [#allocation5], 1
    %12 = vsyncpa %s11, 0
    loop: start=0, step=1, limit=4
    $region2: #{tpu_custom_call.1} parent=1 // loop_pre_header
      _
    $region3: #{tpu_custom_call.1} parent=1 // loop_header
      %s14 = sphi 0, %s18
      %p15 = scmp.ge.s32.totalorder %s14, 4
      %s24 = sphi 0, %s26
      %s27 = sphi 0, %s24
      %s28 = sphi 0, %s27
      %s44 = sphi 0, %s28
      %s50 = sphi 0, %s52
      %s53 = sphi 0, %s50
      %s54 = sphi 0, %s53
      %s70 = sphi 0, %s54
      %s76 = sphi 0, %s78
      %s79 = sphi 0, %s76
      %s80 = sphi 0, %s79
      %s96 = sphi 0, %s80
    $region4: #{tpu_custom_call.1} parent=1 // loop_header_branch
      %17 = sbr.rel (%p15) target = $region8
    $region5: #{tpu_custom_call.1} parent=1 // loop_body
      %s19 = ssub.s32 %s14, 1
      %s20 = ssub.s32 %s14, 2
      %s21 = sadd.s32 %s14, 1
      %s22 = ssub.s32 %s14, %s21
      %p23 = scmp.eq.s32.totalorder %s22, 0
      %s25 = sadd.s32 %s24, 1
      %s26 = scalar_select %p23, %s24, %s25
      %p29 = pneg %p23
      %p30 = scmp.eq.s32.totalorder %s14, 1
      %p31 = por %p29, %p30
      %p32 = scmp.ne.s32.totalorder %s24, %s27
      %p33 = scmp.eq.s32.totalorder %s14, 0
      %p34 = por %p32, %p33
      %p35 = scmp.ne.s32.totalorder %s24, %s27
      %p36 = scmp.eq.s32.totalorder %s19, 1
      %p37 = por %p35, %p36
      %p38 = scmp.ne.s32.totalorder %s27, %s28
      %p39 = scmp.eq.s32.totalorder %s19, 0
      %p40 = por %p38, %p39
      %p41 = scmp.ne.s32.totalorder %s27, %s28
      %p42 = scmp.eq.s32.totalorder %s20, 1
      %p43 = por %p41, %p42
      %p45 = scmp.ne.s32.totalorder %s28, %s44
      %p46 = scmp.eq.s32.totalorder %s20, 0
      %p47 = por %p45, %p46
      %s48 = ssub.s32 %s14, %s21
      %p49 = scmp.eq.s32.totalorder %s48, 0
      %s51 = sadd.s32 %s50, 1
      %s52 = scalar_select %p49, %s50, %s51
      %p55 = pneg %p49
      %p56 = scmp.eq.s32.totalorder %s14, 1
      %p57 = por %p55, %p56
      %p58 = scmp.ne.s32.totalorder %s50, %s53
      %p59 = scmp.eq.s32.totalorder %s14, 0
      %p60 = por %p58, %p59
      %p61 = scmp.ne.s32.totalorder %s50, %s53
      %p62 = scmp.eq.s32.totalorder %s19, 1
      %p63 = por %p61, %p62
      %p64 = scmp.ne.s32.totalorder %s53, %s54
      %p65 = scmp.eq.s32.totalorder %s19, 0
      %p66 = por %p64, %p65
      %p67 = scmp.ne.s32.totalorder %s53, %s54
      %p68 = scmp.eq.s32.totalorder %s20, 1
      %p69 = por %p67, %p68
      %p71 = scmp.ne.s32.totalorder %s54, %s70
      %p72 = scmp.eq.s32.totalorder %s20, 0
      %p73 = por %p71, %p72
      %s74 = ssub.s32 %s14, %s21
      %p75 = scmp.eq.s32.totalorder %s74, 0
      %s77 = sadd.s32 %s76, 1
      %s78 = scalar_select %p75, %s76, %s77
      %p81 = pneg %p75
      %p82 = scmp.eq.s32.totalorder %s14, 1
      %p83 = por %p81, %p82
      %p84 = scmp.ne.s32.totalorder %s76, %s79
      %p85 = scmp.eq.s32.totalorder %s14, 0
      %p86 = por %p84, %p85
      %p87 = scmp.ne.s32.totalorder %s76, %s79
      %p88 = scmp.eq.s32.totalorder %s19, 1
      %p89 = por %p87, %p88
      %p90 = scmp.ne.s32.totalorder %s79, %s80
      %p91 = scmp.eq.s32.totalorder %s19, 0
      %p92 = por %p90, %p91
      %p93 = scmp.ne.s32.totalorder %s79, %s80
      %p94 = scmp.eq.s32.totalorder %s20, 1
      %p95 = por %p93, %p94
      %p97 = scmp.ne.s32.totalorder %s80, %s96
      %p98 = scmp.eq.s32.totalorder %s20, 0
      %p99 = por %p97, %p98
      %p100 = scmp.le.s32.totalorder 1, %s14
      %p101 = scmp.lt.s32.totalorder %s14, 3
      %p102 = pnand %p100, %p101
      %p103 = pneg %p102
      // Predicated region
      $region9: #{tpu_custom_call.1} parent=5 // pred_check
        _
      $region10: #{tpu_custom_call.1} parent=5 // pred_check_branch
        %105 = sbr.rel (%p102) target = $region12
      $region11: #{tpu_custom_call.1} parent=5 // pred_region
        %s106 = ssub.s32 %s14, 1
      $region12: #{tpu_custom_call.1} parent=5 // pred_fallthru
        _
      %p107 = scmp.lt.s32.totalorder %s14, 2
      // Predicated region
      $region13: #{tpu_custom_call.1} parent=5 // pred_check
        %p108 = pneg %p107
      $region14: #{tpu_custom_call.1} parent=5 // pred_check_branch
        %110 = sbr.rel (%p108) target = $region16
      $region15: #{tpu_custom_call.1} parent=5 // pred_region
        // Predicated region
        $region17: #{tpu_custom_call.1} parent=15 // pred_check
          %p111 = pneg %p34
        $region18: #{tpu_custom_call.1} parent=15 // pred_check_branch
          %113 = sbr.rel (%p111) target = $region20
        $region19: #{tpu_custom_call.1} parent=15 // pred_region
          %s114 = sand.u32 %s24, 1
          %s115 = scalar_lea.sflag [#allocation3], %s114
          %s116 = sand.u32 %s24, 1
          %s117 = smul.addr %s116, 32
          %s118 = scalar_lea.vmem [#allocation2], %s117
          %s119 = smul.u32 2, %s14
          %s120 = ssub.s32 3, %s119
          %p121 = scmp.lt.s32.totalorder %s120, 2
          %s122 = scalar_select %p121, %s120, 2
          %s123 = smul.u32 128, %s122
          %s124 = smul.u32 %s123, 2
          %s126 = ssub.s32 512, %s124
          %127 = vsyncadd %s115, %s126
          %p128 = scmp.ne.s32.totalorder 0, %s124
          %s129 = smul.addr %s119, 2
          %s130 = smul.addr %s129, 128
          %s131 = scalar_lea.hbm %s0, %s130
          %s132 = smul.u32 16, %s122
          %s133 = sshll.u32 %s118, 4
          %s134 = int_to_ptr.vmem [resolvable:$true] %s133
          %s135 = sshll.u32 %s132, 4
          %139 = dma.hbm_to_vmem [thread:$0]  (%p128), %s131, %s135, %s134, %s115, 256, 256, 16
        $region20: #{tpu_custom_call.1} parent=15 // pred_fallthru
          _
        // Predicated region
        $region21: #{tpu_custom_call.1} parent=15 // pred_check
          %p140 = pneg %p60
        $region22: #{tpu_custom_call.1} parent=15 // pred_check_branch
          %142 = sbr.rel (%p140) target = $region24
        $region23: #{tpu_custom_call.1} parent=15 // pred_region
          %s143 = sand.u32 %s50, 1
          %s144 = scalar_lea.sflag [#allocation5], %s143
          %s145 = sand.u32 %s50, 1
          %s146 = smul.addr %s145, 32
          %s147 = scalar_lea.vmem [#allocation4], %s146
          %s148 = smul.u32 2, %s14
          %s149 = ssub.s32 3, %s148
          %p150 = scmp.lt.s32.totalorder %s149, 2
          %s151 = scalar_select %p150, %s149, 2
          %s152 = smul.u32 128, %s151
          %s153 = smul.u32 %s152, 2
          %s155 = ssub.s32 512, %s153
          %156 = vsyncadd %s144, %s155
          %p157 = scmp.ne.s32.totalorder 0, %s153
          %s158 = smul.addr %s148, 2
          %s159 = smul.addr %s158, 128
          %s160 = scalar_lea.hbm %s1, %s159
          %s161 = smul.u32 16, %s151
          %s162 = sshll.u32 %s147, 4
          %s163 = int_to_ptr.vmem [resolvable:$true] %s162
          %s164 = sshll.u32 %s161, 4
          %168 = dma.hbm_to_vmem [thread:$0]  (%p157), %s160, %s164, %s163, %s144, 256, 256, 16
        $region24: #{tpu_custom_call.1} parent=15 // pred_fallthru
          _
      $region16: #{tpu_custom_call.1} parent=5 // pred_fallthru
        _
      %p169 = scmp.le.s32.totalorder 1, %s14
      %p170 = scmp.lt.s32.totalorder %s14, 3
      %p171 = pnand %p169, %p170
      %p172 = pneg %p171
      // Predicated region
      $region25: #{tpu_custom_call.1} parent=5 // pred_check
        _
      $region26: #{tpu_custom_call.1} parent=5 // pred_check_branch
        %174 = sbr.rel (%p171) target = $region28
      $region27: #{tpu_custom_call.1} parent=5 // pred_region
        %s175 = ssub.s32 %s14, 1
        %s176 = sand.u32 %s27, 1
        %s177 = scalar_lea.sflag [#allocation3], %s176
        %s178 = sand.u32 %s27, 1
        %s179 = smul.addr %s178, 32
        %s180 = scalar_lea.vmem [#allocation2], %s179
        // Predicated region
        $region29: #{tpu_custom_call.1} parent=27 // pred_check
          %p181 = pneg %p40
        $region30: #{tpu_custom_call.1} parent=27 // pred_check_branch
          %183 = sbr.rel (%p181) target = $region32
        $region31: #{tpu_custom_call.1} parent=27 // pred_region
          %184 = dma.done %s177, 512
        $region32: #{tpu_custom_call.1} parent=27 // pred_fallthru
          _
        %s185 = sand.u32 %s53, 1
        %s186 = scalar_lea.sflag [#allocation5], %s185
        %s187 = sand.u32 %s53, 1
        %s188 = smul.addr %s187, 32
        %s189 = scalar_lea.vmem [#allocation4], %s188
        // Predicated region
        $region33: #{tpu_custom_call.1} parent=27 // pred_check
          %p190 = pneg %p66
        $region34: #{tpu_custom_call.1} parent=27 // pred_check_branch
          %192 = sbr.rel (%p190) target = $region36
        $region35: #{tpu_custom_call.1} parent=27 // pred_region
          %193 = dma.done %s186, 512
        $region36: #{tpu_custom_call.1} parent=27 // pred_fallthru
          _
        %s194 = sand.u32 %s27, 1
        %s195 = scalar_lea.sflag [#allocation3], %s194
        %s196 = sand.u32 %s27, 1
        %s197 = smul.addr %s196, 32
        %s198 = scalar_lea.vmem [#allocation2], %s197
        %p199 = pneg %p40
        %p200 = pneg %p37
        %s201 = sand.u32 %s53, 1
        %s202 = scalar_lea.sflag [#allocation5], %s201
        %s203 = sand.u32 %s53, 1
        %s204 = smul.addr %s203, 32
        %s205 = scalar_lea.vmem [#allocation4], %s204
        %p206 = pneg %p66
        %p207 = pneg %p63
        %p208 = pneg %p92
        %p209 = pneg %p89
        %s210 = sand.u32 %s79, 1
        %s211 = sand.u32 %s79, 1
        %s212 = smul.addr %s211, 16
        %s213 = scalar_lea.vmem [#allocation6], %s212
        %s214 = smul.u32 2, %s19
        %s215 = ssub.s32 3, %s214
        %p216 = scmp.lt.s32.totalorder %s215, 2
        %s217 = scalar_select %p216, %s215, 2
        %s218 = smul.u32 128, %s217
        %s219 = smul.u32 %s218, 2
        %s220 = smul.u32 2, %s19
        %s221 = ssub.s32 3, %s220
        %p222 = scmp.lt.s32.totalorder %s221, 2
        %s223 = scalar_select %p222, %s221, 2
        %s224 = smul.u32 128, %s223
        %s225 = smul.u32 %s224, 2
        %s226 = smul.u32 2, %s19
        %s227 = ssub.s32 3, %s226
        %p228 = scmp.lt.s32.totalorder %s227, 2
        %s229 = scalar_select %p228, %s227, 2
        %s230 = smul.u32 128, %s229
        %v231 = vld [vmem:[%s180] sm:$0xff]
        %v232 = vld [vmem:[%s180 + $0x8] sm:$0xff]
        %v233 = vld [vmem:[%s180 + $0x10] sm:$0xff]
        %v234 = vld [vmem:[%s180 + $0x18] sm:$0xff]
        %v235 = vld [vmem:[%s189] sm:$0xff]
        %v236 = vld [vmem:[%s189 + $0x8] sm:$0xff]
        %v237 = vld [vmem:[%s189 + $0x10] sm:$0xff]
        %v238 = vld [vmem:[%s189 + $0x18] sm:$0xff]
        %vm239 = vcmask 261120
        %v240 = vsel %vm239, %v232, -inf
        %v241 = vmax.f32 %v231, %v240
        %242 = vmax.xlane.f32.xlu0 %v241
        %v243 = vpop.xlane.xlu0 %242
        %v244 = vsel %vm239, %v234, -inf
        %v245 = vmax.f32 %v233, %v244
        %246 = vmax.xlane.f32.xlu0 %v245
        %v247 = vpop.xlane.xlu0 %246
        %v248 = vsub.f32 %v231, %v243
        %v249 = vsub.f32 %v232, %v243
        %v250 = vsub.f32 %v233, %v247
        %v251 = vsub.f32 %v234, %v247
        %v252 = vmul.f32 %v248, 1.442695
        %v253 = vpow.pop %v252
        %v254 = vmul.f32 %v249, 1.442695
        %v255 = vpow.pop %v254
        %v256 = vmul.f32 %v250, 1.442695
        %v257 = vpow.pop %v256
        %v258 = vmul.f32 %v251, 1.442695
        %v259 = vpow.pop %v258
        %v260 = vsel %vm239, %v255, 0.0
        %v261 = vadd.f32 %v253, %v260
        %262 = vadd.xlane.f32.xlu0 %v261
        %v263 = vpop.xlane.xlu0 %262
        %v264 = vsel %vm239, %v259, 0.0
        %v265 = vadd.f32 %v257, %v264
        %266 = vadd.xlane.f32.xlu0 %v265
        %v267 = vpop.xlane.xlu0 %266
        %v268 = vrcp.pop %v263
        %v269 = vrcp.pop %v267
        %v270 = vmul.f32 %v253, %v268
        %v271 = vmul.f32 %v255, %v268
        %v272 = vmul.f32 %v257, %v269
        %v273 = vmul.f32 %v259, %v269
        %v274 = vadd.f32 %v270, 1e-08
        %v275 = vadd.f32 %v271, 1e-08
        %v276 = vadd.f32 %v272, 1e-08
        %v277 = vadd.f32 %v273, 1e-08
        %v278 = vlog2.pop %v274
        %v279 = vmul.f32 %v278, 0.6931472
        %v280 = vlog2.pop %v275
        %v281 = vmul.f32 %v280, 0.6931472
        %v282 = vlog2.pop %v276
        %v283 = vmul.f32 %v282, 0.6931472
        %v284 = vlog2.pop %v277
        %v285 = vmul.f32 %v284, 0.6931472
        %v286 = vmul.f32 %v279, %v235
        %v287 = vmul.f32 %v281, %v236
        %v288 = vmul.f32 %v283, %v237
        %v289 = vmul.f32 %v285, %v238
        %v290 = vsel %vm239, %v287, 0.0
        %v291 = vadd.f32 %v286, %v290
        %292 = vadd.xlane.f32.xlu0 %v291
        %v293 = vpop.xlane.xlu0 %292
        %v294 = vsel %vm239, %v289, 0.0
        %v295 = vadd.f32 %v288, %v294
        %296 = vadd.xlane.f32.xlu0 %v295
        %v297 = vpop.xlane.xlu0 %296
        %v298 = vsub.f32 0.0, %v293
        %v299 = vsub.f32 0.0, %v297
        %vm300 = vcmask 7168
        %301 = vst.msk [vmem:[%s213] sm:$0xff] %vm300, %v298
        %302 = vst.msk [vmem:[%s213 + $0x8] sm:$0xff] %vm300, %v299
        %s303 = sand.u32 %s79, 1
        %s304 = sand.u32 %s79, 1
        %s305 = smul.addr %s304, 16
        %s306 = scalar_lea.vmem [#allocation6], %s305
        // Predicated region
        $region37: #{tpu_custom_call.1} parent=27 // pred_check
          %p307 = pneg %p89
        $region38: #{tpu_custom_call.1} parent=27 // pred_check_branch
          %309 = sbr.rel (%p307) target = $region40
        $region39: #{tpu_custom_call.1} parent=27 // pred_region
          %s310 = smul.u32 2, %s19
          %s311 = ssub.s32 3, %s310
          %p312 = scmp.lt.s32.totalorder %s311, 2
          %s313 = scalar_select %p312, %s311, 2
          %s314 = smul.u32 128, %s313
          %p315 = scmp.ne.s32.totalorder 0, %s314
          %s316 = smul.addr %s310, 8
          %s317 = scalar_lea.vmem %s2, %s316
          // Predicated region
          $region41: #{tpu_custom_call.1} parent=39 // pred_check
            %p318 = pneg %p315
          $region42: #{tpu_custom_call.1} parent=39 // pred_check_branch
            %320 = sbr.rel (%p318) target = $region44
          $region43: #{tpu_custom_call.1} parent=39 // pred_region
            // Predicated region
            $region45: #{tpu_custom_call.1} parent=43 // pred_check
              _
            $region46: #{tpu_custom_call.1} parent=43 // pred_check_branch
              %322 = sbr.rel (0) target = $region48
            $region47: #{tpu_custom_call.1} parent=43 // pred_region
              // Predicated region
              $region67: #{tpu_custom_call.1} parent=47 // pred_check
                _
              $region68: #{tpu_custom_call.1} parent=47 // pred_check_branch
                %373 = sbr.rel (0) target = $region70
              $region69: #{tpu_custom_call.1} parent=47 // pred_region
                %s374 = sshrl.u32 %s313, 1
                // While loop
                $region71: #{tpu_custom_call.1} parent=69 // loop_pre_header
                  _
                $region72: #{tpu_custom_call.1} parent=69 // loop_header
                  %s376 = sphi 0, %s378
                  %p377 = scmp.ge.s32.totalorder %s376, %s374
                  %s381 = sphi 0, %s390
                  %s382 = sphi %s306, %s393
                  %s383 = sphi %s317, %s394
                $region73: #{tpu_custom_call.1} parent=69 // loop_header_branch
                  %380 = sbr.rel (%p377) target = $region77
                $region74: #{tpu_custom_call.1} parent=69 // loop_body
                  %v384 = vld [vmem:[%s382] sm:$0xff]
                  %385 = vst [vmem:[%s383] sm:$0xff] %v384
                  %v386 = vld [vmem:[%s382 + $0x8] sm:$0xff]
                  %387 = vst [vmem:[%s383 + $0x8] sm:$0xff] %v386
                  %s388 = sadd.s32 1, %s381
                  %p389 = scmp.ge.s32.totalorder %s388, %s374
                  %s390 = scalar_select %p389, 0, %s388
                  %s391 = smul.u32 %s390, 16
                  %s392 = smul.u32 %s390, 16
                  %s393 = scalar_lea.vmem %s306, %s391 [#allocation6]
                  %s394 = scalar_lea.vmem %s317, %s392
                $region75: #{tpu_custom_call.1} parent=69 // loop_footer
                  %s378 = sadd.s32 %s376, 1
                $region76: #{tpu_custom_call.1} parent=69 // loop_footer_branch
                  %375 = sbr.rel target = $region72
                $region77: #{tpu_custom_call.1} parent=69 // loop_exit
                  _
                %s395 = sshrl.u32 %s313, 1
                %s396 = sand.u32 %s313, 1
                %s397 = smul.u32 %s395, 2
                %s398 = smul.u32 8, %s397
                %s399 = scalar_lea.vmem %s306, %s398 [#allocation6]
                %s400 = smul.u32 8, %s397
                %s401 = scalar_lea.vmem %s317, %s400
                // While loop
                $region78: #{tpu_custom_call.1} parent=69 // loop_pre_header
                  _
                $region79: #{tpu_custom_call.1} parent=69 // loop_header
                  %s403 = sphi 0, %s405
                  %p404 = scmp.ge.s32.totalorder %s403, %s396
                  %s408 = sphi 0, %s415
                  %s409 = sphi %s399, %s418
                  %s410 = sphi %s401, %s419
                $region80: #{tpu_custom_call.1} parent=69 // loop_header_branch
                  %407 = sbr.rel (%p404) target = $region84
                $region81: #{tpu_custom_call.1} parent=69 // loop_body
                  %v411 = vld [vmem:[%s409] sm:$0xff]
                  %412 = vst [vmem:[%s410] sm:$0xff] %v411
                  %s413 = sadd.s32 1, %s408
                  %p414 = scmp.ge.s32.totalorder %s413, %s396
                  %s415 = scalar_select %p414, 0, %s413
                  %s416 = smul.u32 %s415, 8
                  %s417 = smul.u32 %s415, 8
                  %s418 = scalar_lea.vmem %s399, %s416 [#allocation6]
                  %s419 = scalar_lea.vmem %s401, %s417
                $region82: #{tpu_custom_call.1} parent=69 // loop_footer
                  %s405 = sadd.s32 %s403, 1
                $region83: #{tpu_custom_call.1} parent=69 // loop_footer_branch
                  %402 = sbr.rel target = $region79
                $region84: #{tpu_custom_call.1} parent=69 // loop_exit
                  _
              $region70: #{tpu_custom_call.1} parent=47 // pred_fallthru
                _
              // Predicated region
              $region85: #{tpu_custom_call.1} parent=47 // pred_check
                _
              $region86: #{tpu_custom_call.1} parent=47 // pred_check_branch
                %421 = sbr.rel target = $region88
              $region87: #{tpu_custom_call.1} parent=47 // pred_region
                _
              $region88: #{tpu_custom_call.1} parent=47 // pred_fallthru
                _
            $region48: #{tpu_custom_call.1} parent=43 // pred_fallthru
              _
            // Predicated region
            $region49: #{tpu_custom_call.1} parent=43 // pred_check
              _
            $region50: #{tpu_custom_call.1} parent=43 // pred_check_branch
              %324 = sbr.rel target = $region52
            $region51: #{tpu_custom_call.1} parent=43 // pred_region
              %s326 = sshrl.u32 %s313, 1
              // While loop
              $region53: #{tpu_custom_call.1} parent=51 // loop_pre_header
                _
              $region54: #{tpu_custom_call.1} parent=51 // loop_header
                %s328 = sphi 0, %s330
                %p329 = scmp.ge.s32.totalorder %s328, %s326
                %s333 = sphi 0, %s342
                %s334 = sphi %s306, %s345
                %s335 = sphi %s317, %s346
              $region55: #{tpu_custom_call.1} parent=51 // loop_header_branch
                %332 = sbr.rel (%p329) target = $region59
              $region56: #{tpu_custom_call.1} parent=51 // loop_body
                %v336 = vld [vmem:[%s334] sm:$0xff]
                %337 = vst [vmem:[%s335] sm:$0xff] %v336
                %v338 = vld [vmem:[%s334 + $0x8] sm:$0xff]
                %339 = vst [vmem:[%s335 + $0x8] sm:$0xff] %v338
                %s340 = sadd.s32 1, %s333
                %p341 = scmp.ge.s32.totalorder %s340, %s326
                %s342 = scalar_select %p341, 0, %s340
                %s343 = smul.u32 %s342, 16
                %s344 = smul.u32 %s342, 16
                %s345 = scalar_lea.vmem %s306, %s343 [#allocation6]
                %s346 = scalar_lea.vmem %s317, %s344
              $region57: #{tpu_custom_call.1} parent=51 // loop_footer
                %s330 = sadd.s32 %s328, 1
              $region58: #{tpu_custom_call.1} parent=51 // loop_footer_branch
                %327 = sbr.rel target = $region54
              $region59: #{tpu_custom_call.1} parent=51 // loop_exit
                _
              %s347 = sshrl.u32 %s313, 1
              %s348 = sand.u32 %s313, 1
              %s349 = smul.u32 %s347, 2
              %s350 = smul.u32 8, %s349
              %s351 = scalar_lea.vmem %s306, %s350 [#allocation6]
              %s352 = smul.u32 8, %s349
              %s353 = scalar_lea.vmem %s317, %s352
              // While loop
              $region60: #{tpu_custom_call.1} parent=51 // loop_pre_header
                _
              $region61: #{tpu_custom_call.1} parent=51 // loop_header
                %s355 = sphi 0, %s357
                %p356 = scmp.ge.s32.totalorder %s355, %s348
                %s360 = sphi 0, %s367
                %s361 = sphi %s351, %s370
                %s362 = sphi %s353, %s371
              $region62: #{tpu_custom_call.1} parent=51 // loop_header_branch
                %359 = sbr.rel (%p356) target = $region66
              $region63: #{tpu_custom_call.1} parent=51 // loop_body
                %v363 = vld [vmem:[%s361] sm:$0xff]
                %364 = vst [vmem:[%s362] sm:$0xff] %v363
                %s365 = sadd.s32 1, %s360
                %p366 = scmp.ge.s32.totalorder %s365, %s348
                %s367 = scalar_select %p366, 0, %s365
                %s368 = smul.u32 %s367, 8
                %s369 = smul.u32 %s367, 8
                %s370 = scalar_lea.vmem %s351, %s368 [#allocation6]
                %s371 = scalar_lea.vmem %s353, %s369
              $region64: #{tpu_custom_call.1} parent=51 // loop_footer
                %s357 = sadd.s32 %s355, 1
              $region65: #{tpu_custom_call.1} parent=51 // loop_footer_branch
                %354 = sbr.rel target = $region61
              $region66: #{tpu_custom_call.1} parent=51 // loop_exit
                _
            $region52: #{tpu_custom_call.1} parent=43 // pred_fallthru
              _
          $region44: #{tpu_custom_call.1} parent=39 // pred_fallthru
            _
          %422 = vnop
        $region40: #{tpu_custom_call.1} parent=27 // pred_fallthru
          _
      $region28: #{tpu_custom_call.1} parent=5 // pred_fallthru
        _
      %p423 = scmp.le.s32.totalorder 2, %s14
      // Predicated region
      $region89: #{tpu_custom_call.1} parent=5 // pred_check
        %p424 = pneg %p423
      $region90: #{tpu_custom_call.1} parent=5 // pred_check_branch
        %426 = sbr.rel (%p424) target = $region92
      $region91: #{tpu_custom_call.1} parent=5 // pred_region
        %s427 = ssub.s32 %s14, 2
        // Predicated region
        $region93: #{tpu_custom_call.1} parent=91 // pred_check
          %p428 = pneg %p95
        $region94: #{tpu_custom_call.1} parent=91 // pred_check_branch
          %430 = sbr.rel (%p428) target = $region96
        $region95: #{tpu_custom_call.1} parent=91 // pred_region
          %s431 = sand.u32 %s80, 1
          %s432 = sand.u32 %s80, 1
          %s433 = smul.addr %s432, 16
          %s434 = scalar_lea.vmem [#allocation6], %s433
        $region96: #{tpu_custom_call.1} parent=91 // pred_fallthru
          _
      $region92: #{tpu_custom_call.1} parent=5 // pred_fallthru
        _
    $region6: #{tpu_custom_call.1} parent=1 // loop_footer
      %s18 = sadd.s32 1, %s14
    $region7: #{tpu_custom_call.1} parent=1 // loop_footer_branch
      %13 = sbr.rel target = $region3
    $region8: #{tpu_custom_call.1} parent=1 // loop_exit
      _
    %435 = vsyncpa [#allocation3], 1
    %s436 = scalar_lea.sflag [#allocation3], 1
    %437 = vsyncpa %s436, 1
    %438 = vsyncpa [#allocation5], 1
    %s439 = scalar_lea.sflag [#allocation5], 1
    %440 = vsyncpa %s439, 1

</llo_original>
